<compile_context>
chip_gen: v7x
topology: tpu7x:2x2x1
jax: 0.10.0
libtpu: 0.0.40
codegen_flags: <defaults>
</compile_context>

<pallas_src>
import functools

import jax
import jax.numpy as jnp
from jax import lax
from jax.experimental import pallas as pl
from jax.experimental.pallas import tpu as pltpu


def _round_up(x, m):
    return ((x + m - 1) // m) * m


def _vmem_capacity_bytes():
    try:
        return int(pltpu.get_tpu_info().vmem_capacity_bytes)
    except Exception:
        return 64 << 20  # conservative fallback (v7x per-TC); v5e/v6e have 128 MiB


# ----------------------------------------------------------------------------
# Pallas kernel: fused EnergySum([MSE, L1]) reduction
# ----------------------------------------------------------------------------
def _make_energy_sum_kernel(B, tb, td, rc, row_steps, acc_d, needs_mask):
    """Grid = (parts, row_steps, d_steps); each step reduces one (tb, td) tile."""
    inner_steps = tb // rc
    collapse = acc_d != td  # td is a multiple of 128 and > 128

    def _reduce_tile(c):
        # (rc, td) -> (8, acc_d): only leading-axis splits and lane-aligned 128-chunk
        # adds (pure vreg-to-vreg VPU adds; no cross-lane/sublane movement).
        r = c.reshape(rc // 8, 8, td).sum(axis=0)                 # (8, td)
        if collapse:
            s = r[:, 0:128]
            for q in range(1, td // 128):
                s = s + r[:, q * 128:(q + 1) * 128]
            r = s                                                  # (8, 128)
        return r

    def kernel(out_ref, tgt_ref, loss_ref, acc_ref):
        i = pl.program_id(1)   # row-tile step (reduction axis)
        j = pl.program_id(2)   # lane-tile step (reduction axis)

        @pl.when(jnp.logical_and(i == 0, j == 0))
        def _init():
            acc_ref[...] = jnp.zeros_like(acc_ref)

        row0 = (pl.program_id(0) * row_steps + i) * tb  # unclamped global row start

        def _accumulate(masked):
            def body(k, carry):
                start = pl.multiple_of(k * rc, rc)
                o = out_ref[pl.ds(start, rc), :]
                t = tgt_ref[pl.ds(start, rc), :]
                if o.dtype != jnp.float32:
                    o = o.astype(jnp.float32)
                if t.dtype != jnp.float32:
                    t = t.astype(jnp.float32)
                d = o - t
                # EnergySum([MSE, L1]): fused elementwise contribution.
                c = 0.5 * d * d + jnp.abs(d)
                if masked:
                    rows = row0 + start + lax.broadcasted_iota(
                        jnp.int32, (rc, td), 0)
                    c = jnp.where(rows < B, c, 0.0)
                return carry + _reduce_tile(c)

            part = lax.fori_loop(0, inner_steps, body,
                                 jnp.zeros((8, acc_d), jnp.float32))
            acc_ref[...] += part

        if needs_mask:
            is_tail = row0 + tb > B

            @pl.when(is_tail)
            def _tail():
                _accumulate(True)

            @pl.when(jnp.logical_not(is_tail))
            def _interior():
                _accumulate(False)
        else:
            _accumulate(False)

        @pl.when(jnp.logical_and(i == pl.num_programs(1) - 1,
                                 j == pl.num_programs(2) - 1))
        def _finalize():
            loss_ref[0, 0] = jnp.sum(acc_ref[...])

    return kernel


def energy_sum(output, target, meta_model=None, state=None, *,
               num_parts=1, core_parallel=False,
               target_tile_bytes=4 << 20, chunk_bytes=32 << 10):
    """JAX wrapper mimicking EnergySum([MSEEnergy(), L1Energy()]).forward.

    meta_model / state are abstract in the reference module and have no effect on
    these concrete energies; they are accepted and ignored.
    On v7x pass num_parts=2, core_parallel=True to shard across both TensorCores.
    """
    del meta_model, state
    assert output.shape == target.shape
    if output.ndim == 1:
        output = output.reshape(1, -1)
        target = target.reshape(1, -1)
    elif output.ndim > 2:
        output = output.reshape(-1, output.shape[-1])
        target = target.reshape(output.shape)
    B, D = output.shape

    itemsize = jnp.dtype(output.dtype).itemsize
    sub = {4: 8, 2: 16, 1: 32}.get(itemsize, 8)  # sublane multiple for input dtype

    cap = _vmem_capacity_bytes()
    budget = max(cap - (16 << 20), 24 << 20)  # leave compiler / pipeline headroom

    # Lane (D) tiling only if even a minimal-row, full-D tile would blow VMEM.
    td = D
    if 4 * sub * D * itemsize > budget and D % 128 == 0:
        max_td = max(128, budget // (4 * sub * itemsize))
        for steps in range(2, D // 128 + 1):
            cand = D // steps
            if D % steps == 0 and cand % 128 == 0 and cand <= max_td:
                td = cand
                break
    d_steps = D // td

    # Row tile: VMEM-budget / ~4 MiB-per-input-tile driven, never bigger than data.
    rows_per_part = pl.cdiv(B, num_parts)
    budget_rows = budget // (4 * td * itemsize)          # 2 inputs x double-buffer
    target_rows = max(1, target_tile_bytes // (td * itemsize))
    tb0 = min(budget_rows, target_rows, _round_up(rows_per_part, sub))
    tb0 = max(sub, (tb0 // sub) * sub)

    # In-kernel compute chunk (keeps live vregs small -> no spill stream).
    rc = max(sub, min(tb0, (max(1, chunk_bytes // (td * 4)) // sub) * sub))
    tb = max(rc, (tb0 // rc) * rc)

    row_steps = pl.cdiv(rows_per_part, tb)
    padded_B = num_parts * row_steps * tb
    needs_mask = padded_B != B

    acc_d = 128 if (td % 128 == 0) else td
    last_row_block = (B - 1) // tb  # clamp target for fully out-of-range row blocks

    def in_map(c, i, j):
        # Clamp so every DMA stays in bounds; clamped (fully-OOB) blocks are
        # entirely zeroed by the in-kernel row mask.
        return (jnp.minimum(c * row_steps + i, last_row_block), j)

    in_spec = pl.BlockSpec((tb, td), in_map)
    out_spec = pl.BlockSpec((1, 1), lambda c, i, j: (c, 0), memory_space=pltpu.SMEM)

    parts_sem = (pltpu.CORE_PARALLEL if (core_parallel and num_parts > 1)
                 else "parallel")

    needed = 4 * tb * td * itemsize + 8 * acc_d * 4
    vmem_limit = int(min(max(needed + (4 << 20), 16 << 20),
                         max(cap - (4 << 20), 16 << 20)))

    kernel = _make_energy_sum_kernel(B, tb, td, rc, row_steps, acc_d, needs_mask)

    partials = pl.pallas_call(
        kernel,
        out_shape=jax.ShapeDtypeStruct((num_parts, 1), jnp.float32),
        grid=(num_parts, row_steps, d_steps),
        in_specs=[in_spec, in_spec],
        out_specs=out_spec,
        scratch_shapes=[pltpu.VMEM((8, acc_d), jnp.float32)],
        compiler_params=pltpu.CompilerParams(
            dimension_semantics=(parts_sem, "arbitrary", "arbitrary"),
            vmem_limit_bytes=vmem_limit,
        ),
    )(output, target)
    return jnp.sum(partials)


# Pure-JAX reference of the same EnergySum semantics.
def energy_sum_ref(output, target):
    diff = output.astype(jnp.float32) - target.astype(jnp.float32)
    return 0.5 * jnp.sum(diff * diff) + jnp.sum(jnp.abs(diff))


# TODO(synk): the abstract meta_model / state arguments of EnergyFunction have no
# concrete semantics in the reference code, so they are accepted but unused.


if __name__ == "__main__":
    key = jax.random.PRNGKey(0)
    k_out, k_tgt = jax.random.split(key)

    # (batch, hidden) spiking-network readout vs. target.
    B, D = 16, 128
    output = jax.random.normal(k_out, (B, D), dtype=jnp.float32)
    target = jax.random.normal(k_tgt, (B, D), dtype=jnp.float32)

    loss = jax.block_until_ready(jax.jit(energy_sum)(output, target))
    ref = energy_sum_ref(output, target)
    assert jnp.allclose(loss, ref, rtol=1e-5, atol=1e-5), (loss, ref)

    # Non-divisible batch + 2-part split: exercises the in-kernel tail-mask path
    # and the clamped (fully out-of-range) block path. No jnp.pad anywhere.
    o2 = jax.random.normal(jax.random.PRNGKey(1), (50, 256), dtype=jnp.float32)
    t2 = jax.random.normal(jax.random.PRNGKey(2), (50, 256), dtype=jnp.float32)
    loss2 = jax.block_until_ready(energy_sum(o2, t2, num_parts=2))
    ref2 = energy_sum_ref(o2, t2)
    assert jnp.allclose(loss2, ref2, rtol=1e-5, atol=1e-5), (loss2, ref2)

    # bf16 inputs with narrow, non-128-multiple hidden size (f32 accumulation).
    o3 = jax.random.normal(jax.random.PRNGKey(3), (24, 96), dtype=jnp.bfloat16)
    t3 = jax.random.normal(jax.random.PRNGKey(4), (24, 96), dtype=jnp.bfloat16)
    loss3 = jax.block_until_ready(energy_sum(o3, t3))
    ref3 = energy_sum_ref(o3, t3)
    assert jnp.allclose(loss3, ref3, rtol=2e-2, atol=2e-2), (loss3, ref3)

    print("KERNEL_OK")
</pallas_src>

<mosaic_0001>
module attributes {stable_mosaic.version = 11 : i64} {
  func.func @kernel(%arg0: i32, %arg1: i32, %arg2: i32, %arg3: memref<16x128xf32, #tpu.memory_space<vmem>>, %arg4: memref<16x128xf32, #tpu.memory_space<vmem>>, %arg5: memref<1x1xf32, #tpu.memory_space<smem>>, %arg6: memref<8x128xf32, #tpu.memory_space<vmem>>) attributes {dimension_semantics = [#tpu.dimension_semantics<parallel>, #tpu.dimension_semantics<arbitrary>, #tpu.dimension_semantics<arbitrary>], iteration_bounds = array<i64: 1, 1, 1>, scalar_prefetch = 0 : i64, scratch_operands = 1 : i64, tpu.core_type = #tpu.core_type<tc>, window_params = [{transform_indices = @transform_0, window_bounds = array<i64: 16, 128>}, {transform_indices = @transform_1, window_bounds = array<i64: 16, 128>}, {transform_indices = @transform_2, window_bounds = array<i64: 1, 1>}]} {
    %c0_i32 = arith.constant 0 : i32
    %0 = arith.cmpi eq, %arg1, %c0_i32 : i32
    %c0_i32_0 = arith.constant 0 : i32
    %1 = arith.cmpi eq, %arg2, %c0_i32_0 : i32
    %2 = arith.andi %0, %1 : i1
    %3 = arith.extui %2 : i1 to i32
    %c0_i32_1 = arith.constant 0 : i32
    %4 = arith.cmpi ne, %3, %c0_i32_1 : i32
    scf.if %4 {
      %cst_13 = arith.constant 0.000000e+00 : f32
      %29 = vector.broadcast %cst_13 : f32 to vector<8x128xf32>
      %c0_14 = arith.constant 0 : index
      %c0_15 = arith.constant 0 : index
      %30 = vector.load %arg6[%c0_14, %c0_15] : memref<8x128xf32, #tpu.memory_space<vmem>>, vector<8x128xf32>
      tpu.vector_store %arg6[%c0_14, %c0_15], %29 {strides = array<i32>} : memref<8x128xf32, #tpu.memory_space<vmem>>, vector<8x128xf32>,
    } else {
    }
    %cst = arith.constant 0.000000e+00 : f32
    %5 = vector.broadcast %cst : f32 to vector<8x128xf32>
    %c0_i32_2 = arith.constant 0 : i32
    %c16_i32 = arith.constant 16 : i32
    %6 = arith.muli %c0_i32_2, %c16_i32 : i32
    %7 = tpu.assume_multiple %6, 16 : i32
    %8 = arith.index_cast %7 : i32 to index
    %c0 = arith.constant 0 : index
    %9 = vector.load %arg3[%8, %c0] : memref<16x128xf32, #tpu.memory_space<vmem>>, vector<16x128xf32>
    %10 = arith.index_cast %7 : i32 to index
    %c0_3 = arith.constant 0 : index
    %11 = vector.load %arg4[%10, %c0_3] : memref<16x128xf32, #tpu.memory_space<vmem>>, vector<16x128xf32>
    %12 = arith.subf %9, %11 : vector<16x128xf32>
    %cst_4 = arith.constant 5.000000e-01 : f32
    %13 = vector.broadcast %cst_4 : f32 to vector<16x128xf32>
    %14 = arith.mulf %13, %12 : vector<16x128xf32>
    %15 = arith.mulf %14, %12 : vector<16x128xf32>
    %16 = math.absf %12 : vector<16x128xf32>
    %17 = arith.addf %15, %16 : vector<16x128xf32>
    %18 = vector.shape_cast %17 : vector<16x128xf32> to vector<2x8x128xf32>
    %cst_5 = arith.constant dense<0.000000e+00> : vector<8x128xf32>
    %19 = vector.multi_reduction <add>, %18, %cst_5 [0] : vector<2x8x128xf32> to vector<8x128xf32>
    %20 = arith.addf %5, %19 : vector<8x128xf32>
    %c1_i32 = arith.constant 1 : i32
    %c0_6 = arith.constant 0 : index
    %c0_7 = arith.constant 0 : index
    %21 = vector.load %arg6[%c0_6, %c0_7] : memref<8x128xf32, #tpu.memory_space<vmem>>, vector<8x128xf32>
    %22 = arith.addf %21, %20 : vector<8x128xf32>
    %c0_8 = arith.constant 0 : index
    %c0_9 = arith.constant 0 : index
    %23 = vector.load %arg6[%c0_8, %c0_9] : memref<8x128xf32, #tpu.memory_space<vmem>>, vector<8x128xf32>
    tpu.vector_store %arg6[%c0_8, %c0_9], %22 {strides = array<i32>} : memref<8x128xf32, #tpu.memory_space<vmem>>, vector<8x128xf32>,
    %c0_i32_10 = arith.constant 0 : i32
    %24 = arith.cmpi eq, %arg1, %c0_i32_10 : i32
    %c0_i32_11 = arith.constant 0 : i32
    %25 = arith.cmpi eq, %arg2, %c0_i32_11 : i32
    %26 = arith.andi %24, %25 : i1
    %27 = arith.extui %26 : i1 to i32
    %c0_i32_12 = arith.constant 0 : i32
    %28 = arith.cmpi ne, %27, %c0_i32_12 : i32
    scf.if %28 {
      %c0_13 = arith.constant 0 : index
      %c0_14 = arith.constant 0 : index
      %29 = vector.load %arg6[%c0_13, %c0_14] : memref<8x128xf32, #tpu.memory_space<vmem>>, vector<8x128xf32>
      %30 = vector.shape_cast %29 : vector<8x128xf32> to vector<1x8x128xf32>
      %cst_15 = arith.constant dense<0.000000e+00> : vector<1xf32>
      %31 = vector.multi_reduction <add>, %30, %cst_15 [1, 2] : vector<1x8x128xf32> to vector<1xf32>
      %32 = vector.shape_cast %31 : vector<1xf32> to vector<1x1x1xf32>
      %33 = vector.extract %32[0, 0, 0] : f32 from vector<1x1x1xf32>
      %c0_16 = arith.constant 0 : index
      %c0_17 = arith.constant 0 : index
      %34 = memref.load %arg5[%c0_16, %c0_17] : memref<1x1xf32, #tpu.memory_space<smem>>
      memref.store %33, %arg5[%c0_16, %c0_17] : memref<1x1xf32, #tpu.memory_space<smem>>
    } else {
    }
    return
  }
  func.func @transform_0(%arg0: i32, %arg1: i32, %arg2: i32) -> (i32, i32) {
    %c1_i32 = arith.constant 1 : i32
    %0 = arith.muli %arg0, %c1_i32 : i32
    %1 = arith.addi %0, %arg1 : i32
    %c0_i32 = arith.constant 0 : i32
    %2 = arith.minsi %1, %c0_i32 : i32
    %c0_i32_0 = arith.constant 0 : i32
    return %2, %arg2 : i32, i32
  }
  func.func @transform_1(%arg0: i32, %arg1: i32, %arg2: i32) -> (i32, i32) {
    %c1_i32 = arith.constant 1 : i32
    %0 = arith.muli %arg0, %c1_i32 : i32
    %1 = arith.addi %0, %arg1 : i32
    %c0_i32 = arith.constant 0 : i32
    %2 = arith.minsi %1, %c0_i32 : i32
    %c0_i32_0 = arith.constant 0 : i32
    return %2, %arg2 : i32, i32
  }
  func.func @transform_2(%arg0: i32, %arg1: i32, %arg2: i32) -> (i32, i32) {
    %c0_i32 = arith.constant 0 : i32
    %c0_i32_0 = arith.constant 0 : i32
    return %arg0, %c0_i32 : i32, i32
  }
}

</mosaic_0001>

<llo_original>
// kernel: energy_sum.1
$region0: #{energy_sum.1}
  #allocation0 [shape = 'u32[]', space=smem, size = 0x4, offset = 0x4, fixed_abs, tag = 'smem constant byte address 0x4 - core index']
  #allocation1 [shape = 'u32[144,128]{1,0:T(1,128)}', space=vmem, size = 0x12000, scoped, tag = 'internal scratch']
  #allocation2 [shape = 'f32[8,128]{1,0:T(8,128)}', space=vmem, size = 0x1000, scoped, tag = 'scratch operand']
  %s0 = inlined_call_operand.hbm [shape: f32[16,128], index: 0, kind: input, shape index: {}]
  %s1 = inlined_call_operand.hbm [shape: f32[16,128], index: 1, kind: input, shape index: {}]
  %s2 = inlined_call_operand.hbm [shape: f32[1,1], index: 2, kind: output, shape index: {}]
  %s3 = sld [smem:[#allocation0]]
  $region34: #{energy_sum.1} parent=0
    _
  %s5 = ssub.s32 1, %s3
  %s6 = scalar_select 0, %s5, %s3
  $region1: #{energy_sum.1} parent=0
    #allocation3 [shape = 'u8[8192]{0}', space=vmem, size = 0x2000, scoped, tag = 'input window, operand 0, single buffered']
    #allocation4 [shape = 's32[1]{0}', space=sflag, size = 0x4, scoped, tag = 'scoped memory for energy_sum.1']
    #allocation5 [shape = 's32[1]{0}', space=sflag, size = 0x4, scoped, tag = 'scoped memory for energy_sum.1']
    #allocation6 [shape = 'u8[8192]{0}', space=vmem, size = 0x2000, scoped, tag = 'input window, operand 1, single buffered']
    #allocation7 [shape = 's32[1]{0}', space=sflag, size = 0x4, scoped, tag = 'scoped memory for energy_sum.1']
    #allocation8 [shape = 'u8[512]{0}', space=smem, size = 0x200, scoped, tag = 'output window, operand 0, single buffered']
    %7 = vsyncpa [#allocation4], 0
    %8 = vsyncpa [#allocation7], 0
    %9 = vsyncpa [#allocation5], 0
    // Predicated region
    $region2: #{energy_sum.1} parent=1 // pred_check
      _
    $region3: #{energy_sum.1} parent=1 // pred_check_branch
      %11 = sbr.rel (0) target = $region5
    $region4: #{energy_sum.1} parent=1 // pred_region
      %s12 = sadd.s32 0, 0
      %p13 = scmp.lt.s32.totalorder %s12, 0
      %s14 = scalar_select %p13, %s12, 0
      %s15 = smul.u32 2, %s14
      %s17 = ssub.s32 256, 256
      %18 = vsyncadd [#allocation4], %s17
      %s19 = smul.addr %s15, 128
      %s20 = scalar_lea.hbm %s0, %s19
      %s21 = sshll.u32 [#allocation3], 4
      %s22 = int_to_ptr.vmem [resolvable:$true] %s21
      %27 = dma.hbm_to_vmem [thread:$0]  %s20, 256, %s22, [#allocation4], 128, 128, 8
    $region5: #{energy_sum.1} parent=1 // pred_fallthru
      _
    // Predicated region
    $region6: #{energy_sum.1} parent=1 // pred_check
      _
    $region7: #{energy_sum.1} parent=1 // pred_check_branch
      %29 = sbr.rel (0) target = $region9
    $region8: #{energy_sum.1} parent=1 // pred_region
      %s30 = sadd.s32 0, 0
      %p31 = scmp.lt.s32.totalorder %s30, 0
      %s32 = scalar_select %p31, %s30, 0
      %s33 = smul.u32 2, %s32
      %s35 = ssub.s32 256, 256
      %36 = vsyncadd [#allocation7], %s35
      %s37 = smul.addr %s33, 128
      %s38 = scalar_lea.hbm %s1, %s37
      %s39 = sshll.u32 [#allocation6], 4
      %s40 = int_to_ptr.vmem [resolvable:$true] %s39
      %45 = dma.hbm_to_vmem [thread:$0]  %s38, 256, %s40, [#allocation7], 128, 128, 8
    $region9: #{energy_sum.1} parent=1 // pred_fallthru
      _
    // Predicated region
    $region10: #{energy_sum.1} parent=1 // pred_check
      _
    $region11: #{energy_sum.1} parent=1 // pred_check_branch
      %47 = sbr.rel (0) target = $region13
    $region12: #{energy_sum.1} parent=1 // pred_region
      %48 = dma.done [#allocation4], 256
    $region13: #{energy_sum.1} parent=1 // pred_fallthru
      _
    // Predicated region
    $region14: #{energy_sum.1} parent=1 // pred_check
      _
    $region15: #{energy_sum.1} parent=1 // pred_check_branch
      %50 = sbr.rel (0) target = $region17
    $region16: #{energy_sum.1} parent=1 // pred_region
      %51 = dma.done [#allocation7], 256
    $region17: #{energy_sum.1} parent=1 // pred_fallthru
      _
    %s52 = sadd.s32 0, 0
    %p53 = scmp.lt.s32.totalorder %s52, 0
    %s54 = scalar_select %p53, %s52, 0
    %s55 = smul.u32 2, %s54
    %s56 = sadd.s32 0, 0
    %p57 = scmp.lt.s32.totalorder %s56, 0
    %s58 = scalar_select %p57, %s56, 0
    %s59 = smul.u32 2, %s58
    %p60 = scmp.eq.s32.totalorder 0, 0
    %p61 = scmp.eq.s32.totalorder 0, 0
    %p62 = pnand %p60, %p61
    %p63 = pneg %p62
    // Predicated region
    $region18: #{energy_sum.1} parent=1 // pred_check
      _
    $region19: #{energy_sum.1} parent=1 // pred_check_branch
      %65 = sbr.rel (%p62) target = $region21
    $region20: #{energy_sum.1} parent=1 // pred_region
      %66 = vst [vmem:[#allocation2] sm:$0xff] 0.0
    $region21: #{energy_sum.1} parent=1 // pred_fallthru
      _
    %v67 = vld [vmem:[#allocation3] sm:$0xff]
    %v68 = vld [vmem:[#allocation3 + $0x8] sm:$0xff]
    %v69 = vld [vmem:[#allocation6] sm:$0xff]
    %v70 = vld [vmem:[#allocation6 + $0x8] sm:$0xff]
    %v71 = vsub.f32 %v67, %v69
    %v72 = vsub.f32 %v68, %v70
    %v73 = vmul.f32 %v71, 0.5
    %v74 = vmul.f32 %v72, 0.5
    %v75 = vmul.f32 %v73, %v71
    %v76 = vmul.f32 %v74, %v72
    %v77 = vand.u32 2147483647, %v71
    %v78 = vand.u32 2147483647, %v72
    %v79 = vadd.f32 %v75, %v77
    %v80 = vadd.f32 %v76, %v78
    %v81 = vadd.f32 %v79, %v80
    %v82 = vadd.f32 %v81, 0.0
    %v83 = vld [vmem:[#allocation2] sm:$0xff]
    %v84 = vadd.f32 %v83, %v82
    %85 = vst [vmem:[#allocation2] sm:$0xff] %v84
    // Predicated region
    $region22: #{energy_sum.1} parent=1 // pred_check
      _
    $region23: #{energy_sum.1} parent=1 // pred_check_branch
      %87 = sbr.rel (%p62) target = $region25
    $region24: #{energy_sum.1} parent=1 // pred_region
      %v88 = vld [vmem:[#allocation2] sm:$0xff]
      %89 = vadd.xlane.f32.xlu0 %v88
      %v90 = vpop.xlane.xlu0 %89
      %v91 = vrot.slane %v90, 4
      %v92 = vadd.f32 %v90, %v91
      %v93 = vrot.slane %v92, 2
      %v94 = vadd.f32 %v92, %v93
      %v95 = vrot.slane %v94, 1
      %v96 = vadd.f32 %v94, %v95
      %s97 = vtos %v96
      %s98 = scalar_lea.smem [#allocation8], 0
      %99 = sst [smem:[%s98]] %s97
    $region25: #{energy_sum.1} parent=1 // pred_fallthru
      _
    // Predicated region
    $region26: #{energy_sum.1} parent=1 // pred_check
      _
    $region27: #{energy_sum.1} parent=1 // pred_check_branch
      %101 = sbr.rel (0) target = $region29
    $region28: #{energy_sum.1} parent=1 // pred_region
      %s103 = ssub.s32 16, 16
      %104 = vsyncadd [#allocation5], %s103
      %107 = dma.smem_to_hbm [#allocation8], 16, %s2, [#allocation5]
    $region29: #{energy_sum.1} parent=1 // pred_fallthru
      _
    // Predicated region
    $region30: #{energy_sum.1} parent=1 // pred_check
      _
    $region31: #{energy_sum.1} parent=1 // pred_check_branch
      %109 = sbr.rel (0) target = $region33
    $region32: #{energy_sum.1} parent=1 // pred_region
      %110 = dma.done [#allocation5], 16
    $region33: #{energy_sum.1} parent=1 // pred_fallthru
      _
    %111 = sfence
    %112 = vsyncpa [#allocation4], 1
    %113 = vsyncpa [#allocation7], 1
    %114 = vsyncpa [#allocation5], 1

</llo_original>
